<compile_context>
chip_gen: v7x
topology: tpu7x:2x2x1
jax: 0.10.0
libtpu: 0.0.40
codegen_flags: <defaults>
</compile_context>

<pallas_src>
import functools

import jax
import jax.numpy as jnp
from jax.experimental import pallas as pl
from jax.experimental.pallas import tpu as pltpu


_ACTIVATIONS = {
    "identity": lambda z: z,
    "relu": lambda z: jnp.maximum(z, 0.0),
    "tanh": jnp.tanh,
}


def _parallel_fused_kernel(x_ref, w_ref, b_ref, o_ref, *, dpad: int,
                           activations: tuple):
    """Single-step kernel: one fused matmul for all parallel heads.

    x_ref: (B, Din)        bf16
    w_ref: (Din, M*Dpad)   bf16   -- heads concatenated along the lane dim,
                                      each head zero-padded to Dpad (mult of 128)
    b_ref: (1,  M*Dpad)    f32
    o_ref: (B,  M*Dpad)    f32
    """
    # One MXU matmul covering every head; bf16 operands, f32 accumulate.
    z = jnp.dot(x_ref[...], w_ref[...], preferred_element_type=jnp.float32)
    z = z + b_ref[...]

    # Heads are lane-tile aligned (dpad % 128 == 0): static 128-aligned slices,
    # per-head activation applied only to that head's block, unmasked stores.
    for m, act in enumerate(activations):
        lo = m * dpad
        o_ref[:, lo:lo + dpad] = _ACTIVATIONS[act](
            z[:, lo:lo + dpad]).astype(o_ref.dtype)


def fuse_parallel_params(w_stack, b_stack, lane_tile: int = 128):
    """One-time (param-load-time) fusion of per-head weights/biases.

    w_stack: (M, Din, Dout) f32 -> (Din, M*Dpad) bf16, heads 128-lane padded
    b_stack: (M, 1,  Dout)  f32 -> (1,   M*Dpad) f32
    """
    M, Din, Dout = w_stack.shape
    dpad = ((Dout + lane_tile - 1) // lane_tile) * lane_tile

    w = jnp.transpose(w_stack, (1, 0, 2))                        # (Din, M, Dout)
    w = jnp.pad(w, ((0, 0), (0, 0), (0, dpad - Dout)))           # (Din, M, Dpad)
    w_fused = w.reshape(Din, M * dpad).astype(jnp.bfloat16)

    b = jnp.pad(b_stack.reshape(M, Dout), ((0, 0), (0, dpad - Dout)))
    b_fused = b.reshape(1, M * dpad).astype(jnp.float32)
    return w_fused, b_fused, dpad


@functools.partial(
    jax.jit, static_argnames=("dout", "dpad", "activations", "return_fused"))
def parallel_forward(x, w_fused, b_fused, *, dout: int, dpad: int,
                     activations=("identity", "relu", "tanh"),
                     return_fused: bool = False):
    """Pallas implementation of Parallel(linear, linear+relu, linear+tanh)(x).

    x:       (B, Din) f32;  w_fused/b_fused from fuse_parallel_params.
    Returns a list of M arrays (B, dout) f32 (module semantics), or the fused
    lane-dense (B, M*dpad) slab if return_fused=True.
    """
    B, Din = x.shape
    M = len(activations)
    x_bf16 = x.astype(jnp.bfloat16)

    flops = 2 * B * Din * M * dpad
    bytes_accessed = (x_bf16.size * 2 + w_fused.size * 2
                      + b_fused.size * 4 + B * M * dpad * 4)

    fused = pl.pallas_call(
        functools.partial(_parallel_fused_kernel, dpad=dpad,
                          activations=tuple(activations)),
        out_shape=jax.ShapeDtypeStruct((B, M * dpad), jnp.float32),
        in_specs=[
            pl.BlockSpec(memory_space=pltpu.MemorySpace.VMEM),  # x (bf16)
            pl.BlockSpec(memory_space=pltpu.MemorySpace.VMEM),  # fused weights
            pl.BlockSpec(memory_space=pltpu.MemorySpace.VMEM),  # fused bias
        ],
        out_specs=pl.BlockSpec(memory_space=pltpu.MemorySpace.VMEM),
        cost_estimate=pl.CostEstimate(
            flops=flops, transcendentals=B * dpad,
            bytes_accessed=bytes_accessed),
    )(x_bf16, w_fused, b_fused)

    if return_fused:
        return fused
    # Parallel.forward returns a Python list of each submodule's output; the
    # per-head slices start at 128-aligned lane offsets (wrapper-side plumbing).
    return [fused[:, m * dpad: m * dpad + dout] for m in range(M)]


def _reference(x, w_stack, b_stack):
    """Reference with the same bf16 operand quantization as the kernel."""
    acts = [lambda z: z, lambda z: jnp.maximum(z, 0.0), jnp.tanh]
    x_b = x.astype(jnp.bfloat16)
    outs = []
    for m in range(w_stack.shape[0]):
        z = jnp.dot(x_b, w_stack[m].astype(jnp.bfloat16),
                    preferred_element_type=jnp.float32)
        z = z + b_stack[m, 0]
        outs.append(acts[m](z))
    return outs


if __name__ == "__main__":
    B, Din, Dout, M = 8, 32, 64, 3

    key = jax.random.PRNGKey(0)
    kx, kw, kb = jax.random.split(key, 3)

    x = jax.random.normal(kx, (B, Din), dtype=jnp.float32)
    # Deterministic parameter init (synthetic, analogous to nn.Linear scale).
    w_stack = jax.random.normal(kw, (M, Din, Dout), dtype=jnp.float32) * (
        1.0 / jnp.sqrt(Din))
    b_stack = jax.random.normal(kb, (M, 1, Dout), dtype=jnp.float32) * 0.01

    # Param fusion happens ONCE (param-load time), not in the per-call path.
    w_fused, b_fused, dpad = fuse_parallel_params(w_stack, b_stack)
    w_fused = jax.block_until_ready(w_fused)
    b_fused = jax.block_until_ready(b_fused)

    outs = parallel_forward(x, w_fused, b_fused, dout=Dout, dpad=dpad)
    outs = [jax.block_until_ready(o) for o in outs]

    refs = _reference(x, w_stack, b_stack)
    for o, r in zip(outs, refs):
        assert o.shape == (B, Dout)
        assert jnp.allclose(o, r, atol=1e-3, rtol=1e-3), "mismatch vs reference"

    print("KERNEL_OK")
</pallas_src>

<mosaic_0001>
module attributes {stable_mosaic.version = 11 : i64} {
  func.func @_parallel_fused_kernel(%arg0: memref<8x32xbf16, #tpu.memory_space<vmem>>, %arg1: memref<32x384xbf16, #tpu.memory_space<vmem>>, %arg2: memref<1x384xf32, #tpu.memory_space<vmem>>, %arg3: memref<8x384xf32, #tpu.memory_space<vmem>>) attributes {dimension_semantics = [], scalar_prefetch = 0 : i64, scratch_operands = 0 : i64, tpu.core_type = #tpu.core_type<tc>} {
    %c0 = arith.constant 0 : index
    %c0_0 = arith.constant 0 : index
    %0 = vector.load %arg0[%c0, %c0_0] : memref<8x32xbf16, #tpu.memory_space<vmem>>, vector<8x32xbf16>
    %c0_1 = arith.constant 0 : index
    %c0_2 = arith.constant 0 : index
    %1 = vector.load %arg1[%c0_1, %c0_2] : memref<32x384xbf16, #tpu.memory_space<vmem>>, vector<32x384xbf16>
    %cst = arith.constant dense<0.000000e+00> : vector<8x384xf32>
    %2 = tpu.matmul %0, %1, %cst {dimension_numbers = #tpu.dot_dimension_numbers<[1], [0], [0], [1], [0, 0, 1, 1], [], []>} : vector<8x32xbf16>, vector<32x384xbf16>, vector<8x384xf32> -> vector<8x384xf32>
    %c0_3 = arith.constant 0 : index
    %c0_4 = arith.constant 0 : index
    %3 = vector.load %arg2[%c0_3, %c0_4] : memref<1x384xf32, #tpu.memory_space<vmem>>, vector<1x384xf32>
    %4 = vector.broadcast %3 : vector<1x384xf32> to vector<8x384xf32>
    %5 = arith.addf %2, %4 : vector<8x384xf32>
    %6 = vector.extract_strided_slice %5 {offsets = [0, 0], sizes = [8, 128], strides = [1, 1]} : vector<8x384xf32> to vector<8x128xf32>
    %c0_5 = arith.constant 0 : index
    %c0_6 = arith.constant 0 : index
    %7 = vector.load %arg3[%c0_5, %c0_6] : memref<8x384xf32, #tpu.memory_space<vmem>>, vector<8x128xf32>
    tpu.vector_store %arg3[%c0_5, %c0_6], %6 {strides = array<i32>} : memref<8x384xf32, #tpu.memory_space<vmem>>, vector<8x128xf32>,
    %8 = vector.extract_strided_slice %5 {offsets = [0, 128], sizes = [8, 128], strides = [1, 1]} : vector<8x384xf32> to vector<8x128xf32>
    %cst_7 = arith.constant 0.000000e+00 : f32
    %9 = vector.broadcast %cst_7 : f32 to vector<8x128xf32>
    %10 = arith.maximumf %8, %9 : vector<8x128xf32>
    %c0_8 = arith.constant 0 : index
    %c128 = arith.constant 128 : index
    %11 = vector.load %arg3[%c0_8, %c128] : memref<8x384xf32, #tpu.memory_space<vmem>>, vector<8x128xf32>
    tpu.vector_store %arg3[%c0_8, %c128], %10 {strides = array<i32>} : memref<8x384xf32, #tpu.memory_space<vmem>>, vector<8x128xf32>,
    %12 = vector.extract_strided_slice %5 {offsets = [0, 256], sizes = [8, 128], strides = [1, 1]} : vector<8x384xf32> to vector<8x128xf32>
    %13 = math.tanh %12 : vector<8x128xf32>
    %c0_9 = arith.constant 0 : index
    %c256 = arith.constant 256 : index
    %14 = vector.load %arg3[%c0_9, %c256] : memref<8x384xf32, #tpu.memory_space<vmem>>, vector<8x128xf32>
    tpu.vector_store %arg3[%c0_9, %c256], %13 {strides = array<i32>} : memref<8x384xf32, #tpu.memory_space<vmem>>, vector<8x128xf32>,
    return
  }
}

</mosaic_0001>

<llo_original>
// kernel: parallel_forward.1
$region0: #{parallel_forward.1}
  #allocation0 [shape = 'u32[]', space=smem, size = 0x4, offset = 0x4, fixed_abs, tag = 'smem constant byte address 0x4 - core index']
  #allocation1 [shape = 'u32[144,128]{1,0:T(1,128)}', space=vmem, size = 0x12000, scoped, tag = 'internal scratch']
  %s0 = inlined_call_operand.vmem [shape: bf16[8,32], index: 0, kind: input, shape index: {}]
  %s1 = inlined_call_operand.hbm [shape: bf16[32,384], index: 1, kind: input, shape index: {}]
  %s2 = inlined_call_operand.vmem [shape: f32[1,384], index: 2, kind: input, shape index: {}]
  %s3 = inlined_call_operand.vmem [shape: f32[8,384], index: 3, kind: output, shape index: {}]
  %s4 = sld [smem:[#allocation0]]
  $region26: #{parallel_forward.1} parent=0
    _
  %s6 = ssub.s32 1, %s4
  %s7 = scalar_select 0, %s6, %s4
  $region1: #{parallel_forward.1} parent=0
    #allocation2 [shape = 'u8[24576]{0}', space=vmem, size = 0x6000, scoped, tag = 'input window, operand 1, single buffered']
    #allocation3 [shape = 's32[1]{0}', space=sflag, size = 0x4, scoped, tag = 'scoped memory for parallel_forward.1']
    %8 = vsyncpa [#allocation3], 0
    // Predicated region
    $region2: #{parallel_forward.1} parent=1 // pred_check
      _
    $region3: #{parallel_forward.1} parent=1 // pred_check_branch
      %10 = sbr.rel (0) target = $region5
    $region4: #{parallel_forward.1} parent=1 // pred_region
      _
    $region5: #{parallel_forward.1} parent=1 // pred_fallthru
      _
    // Predicated region
    $region6: #{parallel_forward.1} parent=1 // pred_check
      _
    $region7: #{parallel_forward.1} parent=1 // pred_check_branch
      %12 = sbr.rel (0) target = $region9
    $region8: #{parallel_forward.1} parent=1 // pred_region
      %s14 = ssub.s32 768, 768
      %15 = vsyncadd [#allocation3], %s14
      %s16 = sshll.u32 [#allocation2], 4
      %s17 = int_to_ptr.vmem [resolvable:$true] %s16
      %22 = dma.hbm_to_vmem [thread:$0]  %s1, 768, %s17, [#allocation3], 192, 192, 12
    $region9: #{parallel_forward.1} parent=1 // pred_fallthru
      _
    // Predicated region
    $region10: #{parallel_forward.1} parent=1 // pred_check
      _
    $region11: #{parallel_forward.1} parent=1 // pred_check_branch
      %24 = sbr.rel (0) target = $region13
    $region12: #{parallel_forward.1} parent=1 // pred_region
      _
    $region13: #{parallel_forward.1} parent=1 // pred_fallthru
      _
    // Predicated region
    $region14: #{parallel_forward.1} parent=1 // pred_check
      _
    $region15: #{parallel_forward.1} parent=1 // pred_check_branch
      %26 = sbr.rel (0) target = $region17
    $region16: #{parallel_forward.1} parent=1 // pred_region
      %27 = dma.done [#allocation3], 768
    $region17: #{parallel_forward.1} parent=1 // pred_fallthru
      _
    %v29 = vld [vmem:[%s0] sm:$0xf]
    %v30 = vld [vmem:[#allocation2] sm:$0xff]
    %v31 = vld [vmem:[#allocation2 + $0x8] sm:$0xf]
    %v32 = vld [vmem:[#allocation2 + $0xc] sm:$0xff]
    %v33 = vld [vmem:[#allocation2 + $0x14] sm:$0xf]
    %v34 = vld [vmem:[#allocation2 + $0x18] sm:$0xff]
    %v35 = vld [vmem:[#allocation2 + $0x20] sm:$0xf]
    %v36 = vld [vmem:[#allocation2 + $0x24] sm:$0xff]
    %v37 = vld [vmem:[#allocation2 + $0x2c] sm:$0xf]
    %v38 = vld [vmem:[%s2] sm:$0x7]
    %v40 = vlaneseq
    %v41 = vshrl.u32 %v40, 7
    %v42 = vsub.s32 0, %v41
    %v43 = vrot.slane %v38, %v42
    %v44 = vlaneseq
    %v45 = vshrl.u32 %v44, 7
    %v46 = vsub.s32 1, %v45
    %v47 = vrot.slane %v38, %v46
    %v48 = vlaneseq
    %v49 = vshrl.u32 %v48, 7
    %v50 = vsub.s32 2, %v49
    %v51 = vrot.slane %v38, %v50
    %v63 = vunpack.c.l.b16 %v30
    %v64 = vunpack.c.h.b16 %v30
    %v65 = vunpack.c.l.b16 %v31
    %v66 = vunpack.c.l.b16 %v32
    %v67 = vunpack.c.h.b16 %v32
    %v68 = vunpack.c.l.b16 %v33
    %v69 = vunpack.c.l.b16 %v34
    %v70 = vunpack.c.h.b16 %v34
    %v71 = vunpack.c.l.b16 %v35
    %v72 = vunpack.c.l.b16 %v36
    %v73 = vunpack.c.h.b16 %v36
    %v74 = vunpack.c.l.b16 %v37
    %v75 = vpack.c.b16 %v66, %v63
    %v76 = vpack.c.b16 %v67, %v64
    %v77 = vpack.c.b16 %v68, %v65
    %v78 = vpack.c.b16 %v72, %v69
    %v79 = vpack.c.b16 %v73, %v70
    %v80 = vpack.c.b16 %v74, %v71
    %vm87 = vcmask 261120
    %v89 = vsel %vm87, %v29, 0
    %91 = vmatprep.subr.bf16.mxu0 %v76
    %92 = vmatpush1.bf16.msra.mxu0 %v75
    %93 = vmatprep.subr.bf16.mxu0 %v79
    %94 = vmatpush1.bf16.msra.mxu0 %v78
    %95 = vmatprep.subr.bf16.mxu0 0
    %96 = vmatpush1.bf16.msra.mxu0 0
    %97 = vmatprep.subr.bf16.mxu0 0
    %98 = vmatpush1.bf16.msra.mxu0 0
    %99 = vmatprep.subr.bf16.mxu0 0
    %100 = vmatpush1.bf16.msra.mxu0 0
    %101 = vmatprep.subr.bf16.mxu0 0
    %102 = vmatpush1.bf16.msra.mxu0 0
    %103 = vmatprep.subr.bf16.mxu0 0
    %104 = vmatpush1.bf16.msra.mxu0 0
    %105 = vmatprep.subr.bf16.mxu0 0
    %106 = vmatpush1.bf16.msra.mxu0 0
    %107 = vmatprep.subr.bf16.mxu0 0
    %108 = vmatpush1.bf16.msra.mxu0 0
    %109 = vmatprep.subr.bf16.mxu0 0
    %110 = vmatpush1.bf16.msra.mxu0 0
    %111 = vmatprep.subr.bf16.mxu0 0
    %112 = vmatpush1.bf16.msra.mxu0 0
    %113 = vmatprep.subr.bf16.mxu0 0
    %114 = vmatpush1.bf16.msra.mxu0 0
    %115 = vmatprep.subr.bf16.mxu0 0
    %116 = vmatpush1.bf16.msra.mxu0 0
    %117 = vmatprep.subr.bf16.mxu0 0
    %118 = vmatpush1.bf16.msra.mxu0 0
    %119 = vmatprep.subr.bf16.mxu0 0
    %120 = vmatpush1.bf16.msra.mxu0 0
    %121 = vmatprep.subr.bf16.mxu0 0
    %122 = vmatpush1.bf16.msra.mxu0 0
    %123 = vmatprep.mubr.bf16.mxu0 0
    %124 = vmatmul.mubr.bf16.gmra.mrb[0].mxu0 %v89
    %v125 = vpop.f32.mrb[0].mxu0
    %v126 = vadd.f32 %v43, %v125
    %v127 = vpop.f32.mrb[0].mxu0
    %v128 = vadd.f32 %v47, %v127
    %v129 = vpop.f32.mrb[0].mxu0
    %v130 = vpop.f32.mrb[0].mxu0
    %131 = vdwg.mxu0
    %132 = vmatprep.subr.bf16.mxu0 0
    %133 = vmatpush1.bf16.msra.mxu0 %v77
    %134 = vmatprep.subr.bf16.mxu0 0
    %135 = vmatpush1.bf16.msra.mxu0 %v80
    %136 = vmatprep.subr.bf16.mxu0 0
    %137 = vmatpush1.bf16.msra.mxu0 0
    %138 = vmatprep.subr.bf16.mxu0 0
    %139 = vmatpush1.bf16.msra.mxu0 0
    %140 = vmatprep.subr.bf16.mxu0 0
    %141 = vmatpush1.bf16.msra.mxu0 0
    %142 = vmatprep.subr.bf16.mxu0 0
    %143 = vmatpush1.bf16.msra.mxu0 0
    %144 = vmatprep.subr.bf16.mxu0 0
    %145 = vmatpush1.bf16.msra.mxu0 0
    %146 = vmatprep.subr.bf16.mxu0 0
    %147 = vmatpush1.bf16.msra.mxu0 0
    %148 = vmatprep.subr.bf16.mxu0 0
    %149 = vmatpush1.bf16.msra.mxu0 0
    %150 = vmatprep.subr.bf16.mxu0 0
    %151 = vmatpush1.bf16.msra.mxu0 0
    %152 = vmatprep.subr.bf16.mxu0 0
    %153 = vmatpush1.bf16.msra.mxu0 0
    %154 = vmatprep.subr.bf16.mxu0 0
    %155 = vmatpush1.bf16.msra.mxu0 0
    %156 = vmatprep.subr.bf16.mxu0 0
    %157 = vmatpush1.bf16.msra.mxu0 0
    %158 = vmatprep.subr.bf16.mxu0 0
    %159 = vmatpush1.bf16.msra.mxu0 0
    %160 = vmatprep.subr.bf16.mxu0 0
    %161 = vmatpush1.bf16.msra.mxu0 0
    %162 = vmatprep.subr.bf16.mxu0 0
    %163 = vmatpush1.bf16.msra.mxu0 0
    %164 = vmatprep.mubr.bf16.mxu0 0
    %165 = vmatmul.mubr.bf16.gmra.mrb[0].mxu0 %v89
    %v166 = vpop.f32.mrb[0].mxu0
    %v167 = vadd.f32 %v51, %v166
    %v168 = vpop.f32.mrb[0].mxu0
    %v169 = vpop.f32.mrb[0].mxu0
    %v170 = vpop.f32.mrb[0].mxu0
    %171 = vdwg.mxu0
    %172 = vst [vmem:[%s3] sm:$0xff] %v126
    %v173 = vmax.f32 %v128, 0.0
    %174 = vst [vmem:[%s3 + $0x8] sm:$0xff] %v173
    %v175 = vtanh.pop %v167
    %176 = vst [vmem:[%s3 + $0x10] sm:$0xff] %v175
    // Predicated region
    $region18: #{parallel_forward.1} parent=1 // pred_check
      _
    $region19: #{parallel_forward.1} parent=1 // pred_check_branch
      %178 = sbr.rel (0) target = $region21
    $region20: #{parallel_forward.1} parent=1 // pred_region
      _
    $region21: #{parallel_forward.1} parent=1 // pred_fallthru
      _
    // Predicated region
    $region22: #{parallel_forward.1} parent=1 // pred_check
      _
    $region23: #{parallel_forward.1} parent=1 // pred_check_branch
      %180 = sbr.rel (0) target = $region25
    $region24: #{parallel_forward.1} parent=1 // pred_region
      _
    $region25: #{parallel_forward.1} parent=1 // pred_fallthru
      _
    %181 = vsyncpa [#allocation3], 1

</llo_original>
